<compile_context>
chip_gen: v7x
topology: tpu7x:2x2x1
jax: 0.10.0
libtpu: 0.0.40
codegen_flags: <defaults>
</compile_context>

<pallas_src>
import math

import jax
import jax.numpy as jnp
from jax.experimental import pallas as pl
from jax.experimental.pallas import tpu as pltpu

F_IN = 26
MAX_TILE_B = 4096  # sweepable; x block = 416 KB f32 at 4096, well under VMEM


def _round_up(x, m):
    return ((x + m - 1) // m) * m


def _choose_tile_b(batch, max_tile=MAX_TILE_B):
    """Batch tile (lane axis): multiple of 128, ~B/2 so v7x's 2 TCs both get
    work once B > 256, capped at max_tile to bound VMEM / padding."""
    tile = min(max_tile, _round_up(max(-(-batch // 2), 1), 128))
    return max(tile, 128)


def _mlp_kernel(x_ref,
                w1_ref, b1_ref,
                w2_ref, b2_ref,
                w3_ref, b3_ref,
                w4_ref, b4_ref,
                wo_ref, bo_ref,
                o_ref):
    # x_ref: (tile_b, 26) f32, straight from HBM. Flip to batch-on-lanes with
    # an XLU transpose (idle slot), then cast to bf16 so every matmul pushes
    # the tiny weights through the MXU with N = tile_b full lanes and the
    # final store is a lane-dense (1, tile_b) slab.
    h = x_ref[...].T.astype(jnp.bfloat16)                       # (26, tile_b)

    # fc1 + relu
    h = jnp.dot(w1_ref[...], h, preferred_element_type=jnp.float32) + b1_ref[...]
    h = jnp.maximum(h, 0.0).astype(jnp.bfloat16)                # (32, tile_b)
    # fc2 + relu
    h = jnp.dot(w2_ref[...], h, preferred_element_type=jnp.float32) + b2_ref[...]
    h = jnp.maximum(h, 0.0).astype(jnp.bfloat16)                # (32, tile_b)
    # fc3 + relu
    h = jnp.dot(w3_ref[...], h, preferred_element_type=jnp.float32) + b3_ref[...]
    h = jnp.maximum(h, 0.0).astype(jnp.bfloat16)                # (16, tile_b)
    # dropout(p=0.25) — identity in eval mode.
    # TODO(synk): training-mode dropout (p=0.25 / p=0.5) not implemented.
    # fc4 + relu
    h = jnp.dot(w4_ref[...], h, preferred_element_type=jnp.float32) + b4_ref[...]
    h = jnp.maximum(h, 0.0).astype(jnp.bfloat16)                # (8, tile_b)
    # dropout(p=0.5) — identity in eval mode.
    # out + exact sigmoid, lane-dense (1, tile_b) store
    z = jnp.dot(wo_ref[...], h, preferred_element_type=jnp.float32) + bo_ref[...]
    o_ref[...] = 1.0 / (1.0 + jnp.exp(-z))


def net_forward(x, params, max_tile_b=MAX_TILE_B):
    """x: (B, 26) float32 -> (B, 1) float32 (eval-mode forward)."""
    B, F = x.shape
    assert F == F_IN
    tile_b = _choose_tile_b(B, max_tile_b)
    n_tiles = pl.cdiv(B, tile_b)

    flat, flat_specs = [], []
    for w, b in params:                  # w: (out, in) f32, b: (out, 1) f32
        flat += [w.astype(jnp.bfloat16), b]
        # Constant index_map -> fetched once, stays VMEM-resident (~10 KB).
        flat_specs += [pl.BlockSpec(w.shape, lambda i: (0, 0)),
                       pl.BlockSpec(b.shape, lambda i: (0, 0))]

    out = pl.pallas_call(
        _mlp_kernel,
        out_shape=jax.ShapeDtypeStruct((1, B), jnp.float32),
        grid=(n_tiles,),
        # x consumed raw (f32, un-transposed, un-padded). Ragged last block:
        # padded reads / masked writes; garbage columns are sliced implicitly.
        in_specs=[pl.BlockSpec((tile_b, F), lambda i: (i, 0))] + flat_specs,
        out_specs=pl.BlockSpec((1, tile_b), lambda i: (0, i)),
        compiler_params=pltpu.CompilerParams(
            dimension_semantics=("parallel",),
            vmem_limit_bytes=32 * 1024 * 1024,   # footprint is ~2-3 MB at 4096
        ),
    )(x, *flat)

    return out.reshape(B, 1)


def init_params(key):
    """nn.Linear default init (uniform ±1/sqrt(fan_in)).

    Weights in PyTorch layout (out_features, in_features); biases (out, 1).
    """
    dims = [(26, 32), (32, 32), (32, 16), (16, 8), (8, 1)]
    params = []
    for fan_in, fan_out in dims:
        key, kw, kb = jax.random.split(key, 3)
        bound = 1.0 / math.sqrt(fan_in)
        w = jax.random.uniform(kw, (fan_out, fan_in), jnp.float32, -bound, bound)
        b = jax.random.uniform(kb, (fan_out, 1), jnp.float32, -bound, bound)
        params.append((w, b))
    return params


def net_forward_ref(x, params):
    """Pure-JAX reference mirroring the kernel's bf16 casts (f32 accumulate)."""
    h = x.astype(jnp.bfloat16).astype(jnp.float32)
    for i, (w, b) in enumerate(params):
        wf = w.astype(jnp.bfloat16).astype(jnp.float32)
        h = h @ wf.T + b.reshape(1, -1)
        if i < len(params) - 1:
            h = jnp.maximum(h, 0.0).astype(jnp.bfloat16).astype(jnp.float32)
    return jax.nn.sigmoid(h)


if __name__ == "__main__":
    key = jax.random.PRNGKey(0)
    key, kx = jax.random.split(key)
    B = 8
    x = jax.random.normal(kx, (B, 26), jnp.float32)
    params = init_params(key)

    out = jax.block_until_ready(net_forward(x, params))
    ref = net_forward_ref(x, params)

    assert out.shape == (B, 1)
    assert jnp.allclose(out, ref, atol=2e-3, rtol=2e-3), "mismatch vs reference"
    print("KERNEL_OK")
</pallas_src>

<mosaic_0001>
module attributes {stable_mosaic.version = 11 : i64} {
  func.func @_mlp_kernel(%arg0: i32, %arg1: memref<128x26xf32, #tpu.memory_space<vmem>>, %arg2: memref<32x26xbf16, #tpu.memory_space<vmem>>, %arg3: memref<32x1xf32, #tpu.memory_space<vmem>>, %arg4: memref<32x32xbf16, #tpu.memory_space<vmem>>, %arg5: memref<32x1xf32, #tpu.memory_space<vmem>>, %arg6: memref<16x32xbf16, #tpu.memory_space<vmem>>, %arg7: memref<16x1xf32, #tpu.memory_space<vmem>>, %arg8: memref<8x16xbf16, #tpu.memory_space<vmem>>, %arg9: memref<8x1xf32, #tpu.memory_space<vmem>>, %arg10: memref<1x8xbf16, #tpu.memory_space<vmem>>, %arg11: memref<1x1xf32, #tpu.memory_space<vmem>>, %arg12: memref<1x128xf32, #tpu.memory_space<vmem>>) attributes {dimension_semantics = [#tpu.dimension_semantics<parallel>], iteration_bounds = array<i64: 1>, scalar_prefetch = 0 : i64, scratch_operands = 0 : i64, tpu.core_type = #tpu.core_type<tc>, window_params = [{transform_indices = @transform_0, window_bounds = array<i64: 128, 26>}, {pipeline_mode = #tpu.pipeline_mode<synchronous>, transform_indices = @transform_1, window_bounds = array<i64: 32, 26>}, {pipeline_mode = #tpu.pipeline_mode<synchronous>, transform_indices = @transform_2, window_bounds = array<i64: 32, 1>}, {pipeline_mode = #tpu.pipeline_mode<synchronous>, transform_indices = @transform_3, window_bounds = array<i64: 32, 32>}, {pipeline_mode = #tpu.pipeline_mode<synchronous>, transform_indices = @transform_4, window_bounds = array<i64: 32, 1>}, {pipeline_mode = #tpu.pipeline_mode<synchronous>, transform_indices = @transform_5, window_bounds = array<i64: 16, 32>}, {pipeline_mode = #tpu.pipeline_mode<synchronous>, transform_indices = @transform_6, window_bounds = array<i64: 16, 1>}, {pipeline_mode = #tpu.pipeline_mode<synchronous>, transform_indices = @transform_7, window_bounds = array<i64: 8, 16>}, {pipeline_mode = #tpu.pipeline_mode<synchronous>, transform_indices = @transform_8, window_bounds = array<i64: 8, 1>}, {pipeline_mode = #tpu.pipeline_mode<synchronous>, transform_indices = @transform_9, window_bounds = array<i64: 1, 8>}, {pipeline_mode = #tpu.pipeline_mode<synchronous>, transform_indices = @transform_10, window_bounds = array<i64: 1, 1>}, {transform_indices = @transform_11, window_bounds = array<i64: 1, 128>}]} {
    %c0 = arith.constant 0 : index
    %c0_0 = arith.constant 0 : index
    %0 = vector.load %arg1[%c0, %c0_0] : memref<128x26xf32, #tpu.memory_space<vmem>>, vector<128x26xf32>
    %1 = tpu.transpose %0, [1, 0] : vector<128x26xf32> -> vector<26x128xf32>
    %2 = arith.truncf %1 : vector<26x128xf32> to vector<26x128xbf16>
    %c0_1 = arith.constant 0 : index
    %c0_2 = arith.constant 0 : index
    %3 = vector.load %arg2[%c0_1, %c0_2] : memref<32x26xbf16, #tpu.memory_space<vmem>>, vector<32x26xbf16>
    %cst = arith.constant dense<0.000000e+00> : vector<32x128xf32>
    %4 = tpu.matmul %3, %2, %cst {dimension_numbers = #tpu.dot_dimension_numbers<[1], [0], [0], [1], [0, 0, 1, 1], [], []>} : vector<32x26xbf16>, vector<26x128xbf16>, vector<32x128xf32> -> vector<32x128xf32>
    %c0_3 = arith.constant 0 : index
    %c0_4 = arith.constant 0 : index
    %5 = vector.load %arg3[%c0_3, %c0_4] : memref<32x1xf32, #tpu.memory_space<vmem>>, vector<32x1xf32>
    %6 = vector.broadcast %5 : vector<32x1xf32> to vector<32x128xf32>
    %7 = arith.addf %4, %6 : vector<32x128xf32>
    %cst_5 = arith.constant 0.000000e+00 : f32
    %8 = vector.broadcast %cst_5 : f32 to vector<32x128xf32>
    %9 = arith.maximumf %7, %8 : vector<32x128xf32>
    %10 = arith.truncf %9 : vector<32x128xf32> to vector<32x128xbf16>
    %c0_6 = arith.constant 0 : index
    %c0_7 = arith.constant 0 : index
    %11 = vector.load %arg4[%c0_6, %c0_7] : memref<32x32xbf16, #tpu.memory_space<vmem>>, vector<32x32xbf16>
    %cst_8 = arith.constant dense<0.000000e+00> : vector<32x128xf32>
    %12 = tpu.matmul %11, %10, %cst_8 {dimension_numbers = #tpu.dot_dimension_numbers<[1], [0], [0], [1], [0, 0, 1, 1], [], []>} : vector<32x32xbf16>, vector<32x128xbf16>, vector<32x128xf32> -> vector<32x128xf32>
    %c0_9 = arith.constant 0 : index
    %c0_10 = arith.constant 0 : index
    %13 = vector.load %arg5[%c0_9, %c0_10] : memref<32x1xf32, #tpu.memory_space<vmem>>, vector<32x1xf32>
    %14 = vector.broadcast %13 : vector<32x1xf32> to vector<32x128xf32>
    %15 = arith.addf %12, %14 : vector<32x128xf32>
    %cst_11 = arith.constant 0.000000e+00 : f32
    %16 = vector.broadcast %cst_11 : f32 to vector<32x128xf32>
    %17 = arith.maximumf %15, %16 : vector<32x128xf32>
    %18 = arith.truncf %17 : vector<32x128xf32> to vector<32x128xbf16>
    %c0_12 = arith.constant 0 : index
    %c0_13 = arith.constant 0 : index
    %19 = vector.load %arg6[%c0_12, %c0_13] : memref<16x32xbf16, #tpu.memory_space<vmem>>, vector<16x32xbf16>
    %cst_14 = arith.constant dense<0.000000e+00> : vector<16x128xf32>
    %20 = tpu.matmul %19, %18, %cst_14 {dimension_numbers = #tpu.dot_dimension_numbers<[1], [0], [0], [1], [0, 0, 1, 1], [], []>} : vector<16x32xbf16>, vector<32x128xbf16>, vector<16x128xf32> -> vector<16x128xf32>
    %c0_15 = arith.constant 0 : index
    %c0_16 = arith.constant 0 : index
    %21 = vector.load %arg7[%c0_15, %c0_16] : memref<16x1xf32, #tpu.memory_space<vmem>>, vector<16x1xf32>
    %22 = vector.broadcast %21 : vector<16x1xf32> to vector<16x128xf32>
    %23 = arith.addf %20, %22 : vector<16x128xf32>
    %cst_17 = arith.constant 0.000000e+00 : f32
    %24 = vector.broadcast %cst_17 : f32 to vector<16x128xf32>
    %25 = arith.maximumf %23, %24 : vector<16x128xf32>
    %26 = arith.truncf %25 : vector<16x128xf32> to vector<16x128xbf16>
    %c0_18 = arith.constant 0 : index
    %c0_19 = arith.constant 0 : index
    %27 = vector.load %arg8[%c0_18, %c0_19] : memref<8x16xbf16, #tpu.memory_space<vmem>>, vector<8x16xbf16>
    %cst_20 = arith.constant dense<0.000000e+00> : vector<8x128xf32>
    %28 = tpu.matmul %27, %26, %cst_20 {dimension_numbers = #tpu.dot_dimension_numbers<[1], [0], [0], [1], [0, 0, 1, 1], [], []>} : vector<8x16xbf16>, vector<16x128xbf16>, vector<8x128xf32> -> vector<8x128xf32>
    %c0_21 = arith.constant 0 : index
    %c0_22 = arith.constant 0 : index
    %29 = vector.load %arg9[%c0_21, %c0_22] : memref<8x1xf32, #tpu.memory_space<vmem>>, vector<8x1xf32>
    %30 = vector.broadcast %29 : vector<8x1xf32> to vector<8x128xf32>
    %31 = arith.addf %28, %30 : vector<8x128xf32>
    %cst_23 = arith.constant 0.000000e+00 : f32
    %32 = vector.broadcast %cst_23 : f32 to vector<8x128xf32>
    %33 = arith.maximumf %31, %32 : vector<8x128xf32>
    %34 = arith.truncf %33 : vector<8x128xf32> to vector<8x128xbf16>
    %c0_24 = arith.constant 0 : index
    %c0_25 = arith.constant 0 : index
    %35 = vector.load %arg10[%c0_24, %c0_25] : memref<1x8xbf16, #tpu.memory_space<vmem>>, vector<1x8xbf16>
    %cst_26 = arith.constant dense<0.000000e+00> : vector<1x128xf32>
    %36 = tpu.matmul %35, %34, %cst_26 {dimension_numbers = #tpu.dot_dimension_numbers<[1], [0], [0], [1], [0, 0, 1, 1], [], []>} : vector<1x8xbf16>, vector<8x128xbf16>, vector<1x128xf32> -> vector<1x128xf32>
    %c0_27 = arith.constant 0 : index
    %c0_28 = arith.constant 0 : index
    %37 = vector.load %arg11[%c0_27, %c0_28] : memref<1x1xf32, #tpu.memory_space<vmem>>, vector<1x1xf32>
    %38 = vector.broadcast %37 : vector<1x1xf32> to vector<1x128xf32>
    %39 = arith.addf %36, %38 : vector<1x128xf32>
    %cst_29 = arith.constant 0.000000e+00 : f32
    %40 = vector.broadcast %cst_29 : f32 to vector<1x128xf32>
    %41 = arith.subf %40, %39 : vector<1x128xf32>
    %42 = math.exp %41 : vector<1x128xf32>
    %cst_30 = arith.constant 1.000000e+00 : f32
    %43 = vector.broadcast %cst_30 : f32 to vector<1x128xf32>
    %44 = arith.addf %43, %42 : vector<1x128xf32>
    %cst_31 = arith.constant 1.000000e+00 : f32
    %45 = vector.broadcast %cst_31 : f32 to vector<1x128xf32>
    %46 = arith.divf %45, %44 : vector<1x128xf32>
    %c0_32 = arith.constant 0 : index
    %c0_33 = arith.constant 0 : index
    %47 = vector.load %arg12[%c0_32, %c0_33] : memref<1x128xf32, #tpu.memory_space<vmem>>, vector<1x128xf32>
    tpu.vector_store %arg12[%c0_32, %c0_33], %46 {strides = array<i32>} : memref<1x128xf32, #tpu.memory_space<vmem>>, vector<1x128xf32>,
    return
  }
  func.func @transform_0(%arg0: i32) -> (i32, i32) {
    %c0_i32 = arith.constant 0 : i32
    %c0_i32_0 = arith.constant 0 : i32
    return %arg0, %c0_i32 : i32, i32
  }
  func.func @transform_1(%arg0: i32) -> (i32, i32) {
    %c0_i32 = arith.constant 0 : i32
    %c0_i32_0 = arith.constant 0 : i32
    %c0_i32_1 = arith.constant 0 : i32
    return %c0_i32, %c0_i32_0 : i32, i32
  }
  func.func @transform_2(%arg0: i32) -> (i32, i32) {
    %c0_i32 = arith.constant 0 : i32
    %c0_i32_0 = arith.constant 0 : i32
    %c0_i32_1 = arith.constant 0 : i32
    return %c0_i32, %c0_i32_0 : i32, i32
  }
  func.func @transform_3(%arg0: i32) -> (i32, i32) {
    %c0_i32 = arith.constant 0 : i32
    %c0_i32_0 = arith.constant 0 : i32
    %c0_i32_1 = arith.constant 0 : i32
    return %c0_i32, %c0_i32_0 : i32, i32
  }
  func.func @transform_4(%arg0: i32) -> (i32, i32) {
    %c0_i32 = arith.constant 0 : i32
    %c0_i32_0 = arith.constant 0 : i32
    %c0_i32_1 = arith.constant 0 : i32
    return %c0_i32, %c0_i32_0 : i32, i32
  }
  func.func @transform_5(%arg0: i32) -> (i32, i32) {
    %c0_i32 = arith.constant 0 : i32
    %c0_i32_0 = arith.constant 0 : i32
    %c0_i32_1 = arith.constant 0 : i32
    return %c0_i32, %c0_i32_0 : i32, i32
  }
  func.func @transform_6(%arg0: i32) -> (i32, i32) {
    %c0_i32 = arith.constant 0 : i32
    %c0_i32_0 = arith.constant 0 : i32
    %c0_i32_1 = arith.constant 0 : i32
    return %c0_i32, %c0_i32_0 : i32, i32
  }
  func.func @transform_7(%arg0: i32) -> (i32, i32) {
    %c0_i32 = arith.constant 0 : i32
    %c0_i32_0 = arith.constant 0 : i32
    %c0_i32_1 = arith.constant 0 : i32
    return %c0_i32, %c0_i32_0 : i32, i32
  }
  func.func @transform_8(%arg0: i32) -> (i32, i32) {
    %c0_i32 = arith.constant 0 : i32
    %c0_i32_0 = arith.constant 0 : i32
    %c0_i32_1 = arith.constant 0 : i32
    return %c0_i32, %c0_i32_0 : i32, i32
  }
  func.func @transform_9(%arg0: i32) -> (i32, i32) {
    %c0_i32 = arith.constant 0 : i32
    %c0_i32_0 = arith.constant 0 : i32
    %c0_i32_1 = arith.constant 0 : i32
    return %c0_i32, %c0_i32_0 : i32, i32
  }
  func.func @transform_10(%arg0: i32) -> (i32, i32) {
    %c0_i32 = arith.constant 0 : i32
    %c0_i32_0 = arith.constant 0 : i32
    %c0_i32_1 = arith.constant 0 : i32
    return %c0_i32, %c0_i32_0 : i32, i32
  }
  func.func @transform_11(%arg0: i32) -> (i32, i32) {
    %c0_i32 = arith.constant 0 : i32
    %c0_i32_0 = arith.constant 0 : i32
    return %c0_i32, %arg0 : i32, i32
  }
}

</mosaic_0001>

<llo_original>
// kernel: tpu_custom_call.1
$region0: #{tpu_custom_call.1}
  #allocation0 [shape = 'u32[]', space=smem, size = 0x4, offset = 0x4, fixed_abs, tag = 'smem constant byte address 0x4 - core index']
  #allocation1 [shape = 'u32[144,128]{1,0:T(1,128)}', space=vmem, size = 0x12000, scoped, tag = 'internal scratch']
  #allocation2 [shape = 'f32[1,1]{1,0:T(1,128)S(1)}', space=vmem, size = 0x200, scoped, tag = 'scoped memory for tpu_custom_call.1']
  %s0 = inlined_call_operand.vmem [shape: f32[8,26], index: 0, kind: input, shape index: {}]
  %s1 = inlined_call_operand.vmem [shape: bf16[32,26], index: 1, kind: input, shape index: {}]
  %s2 = inlined_call_operand.vmem [shape: f32[32,1], index: 2, kind: input, shape index: {}]
  %s3 = inlined_call_operand.vmem [shape: bf16[32,32], index: 3, kind: input, shape index: {}]
  %s4 = inlined_call_operand.vmem [shape: f32[32,1], index: 4, kind: input, shape index: {}]
  %s5 = inlined_call_operand.vmem [shape: bf16[16,32], index: 5, kind: input, shape index: {}]
  %s6 = inlined_call_operand.vmem [shape: f32[16,1], index: 6, kind: input, shape index: {}]
  %s7 = inlined_call_operand.vmem [shape: bf16[8,16], index: 7, kind: input, shape index: {}]
  %s8 = inlined_call_operand.vmem [shape: f32[8,1], index: 8, kind: input, shape index: {}]
  %s9 = inlined_call_operand.vmem [shape: bf16[1,8], index: 9, kind: input, shape index: {}]
  %s10 = inlined_call_operand.<no memory space> [shape: f32[1,1], index: 10, kind: input, shape index: {}]
  %s11 = inlined_call_operand.hbm [shape: f32[1,8], index: 11, kind: output, shape index: {}]
  %s12 = sld [smem:[#allocation0]]
  $region54: #{tpu_custom_call.1} parent=0
    _
  %s14 = ssub.s32 1, %s12
  %s15 = scalar_select 0, %s14, %s12
  %v16 = vstv %s10
  %17 = vst [vmem:[#allocation2] sm:$0x1] %v16
  $region1: #{tpu_custom_call.1} parent=0
    #allocation3 [shape = 'u8[512]{0}', space=vmem, size = 0x400, scoped, tag = 'output window, operand 0, single buffered']
    #allocation4 [shape = 's32[1]{0}', space=sflag, size = 0x4, scoped, tag = 'scoped memory for tpu_custom_call.1']
    %18 = vsyncpa [#allocation4], 0
    // Predicated region
    $region2: #{tpu_custom_call.1} parent=1 // pred_check
      _
    $region3: #{tpu_custom_call.1} parent=1 // pred_check_branch
      %20 = sbr.rel (0) target = $region5
    $region4: #{tpu_custom_call.1} parent=1 // pred_region
      _
    $region5: #{tpu_custom_call.1} parent=1 // pred_fallthru
      _
    // Predicated region
    $region6: #{tpu_custom_call.1} parent=1 // pred_check
      _
    $region7: #{tpu_custom_call.1} parent=1 // pred_check_branch
      %22 = sbr.rel (0) target = $region9
    $region8: #{tpu_custom_call.1} parent=1 // pred_region
      _
    $region9: #{tpu_custom_call.1} parent=1 // pred_fallthru
      _
    // Predicated region
    $region10: #{tpu_custom_call.1} parent=1 // pred_check
      _
    $region11: #{tpu_custom_call.1} parent=1 // pred_check_branch
      %24 = sbr.rel (0) target = $region13
    $region12: #{tpu_custom_call.1} parent=1 // pred_region
      _
    $region13: #{tpu_custom_call.1} parent=1 // pred_fallthru
      _
    // Predicated region
    $region14: #{tpu_custom_call.1} parent=1 // pred_check
      _
    $region15: #{tpu_custom_call.1} parent=1 // pred_check_branch
      %26 = sbr.rel (0) target = $region17
    $region16: #{tpu_custom_call.1} parent=1 // pred_region
      _
    $region17: #{tpu_custom_call.1} parent=1 // pred_fallthru
      _
    // Predicated region
    $region18: #{tpu_custom_call.1} parent=1 // pred_check
      _
    $region19: #{tpu_custom_call.1} parent=1 // pred_check_branch
      %28 = sbr.rel (0) target = $region21
    $region20: #{tpu_custom_call.1} parent=1 // pred_region
      _
    $region21: #{tpu_custom_call.1} parent=1 // pred_fallthru
      _
    // Predicated region
    $region22: #{tpu_custom_call.1} parent=1 // pred_check
      _
    $region23: #{tpu_custom_call.1} parent=1 // pred_check_branch
      %30 = sbr.rel (0) target = $region25
    $region24: #{tpu_custom_call.1} parent=1 // pred_region
      _
    $region25: #{tpu_custom_call.1} parent=1 // pred_fallthru
      _
    // Predicated region
    $region26: #{tpu_custom_call.1} parent=1 // pred_check
      _
    $region27: #{tpu_custom_call.1} parent=1 // pred_check_branch
      %32 = sbr.rel (0) target = $region29
    $region28: #{tpu_custom_call.1} parent=1 // pred_region
      _
    $region29: #{tpu_custom_call.1} parent=1 // pred_fallthru
      _
    // Predicated region
    $region30: #{tpu_custom_call.1} parent=1 // pred_check
      _
    $region31: #{tpu_custom_call.1} parent=1 // pred_check_branch
      %34 = sbr.rel (0) target = $region33
    $region32: #{tpu_custom_call.1} parent=1 // pred_region
      _
    $region33: #{tpu_custom_call.1} parent=1 // pred_fallthru
      _
    // Predicated region
    $region34: #{tpu_custom_call.1} parent=1 // pred_check
      _
    $region35: #{tpu_custom_call.1} parent=1 // pred_check_branch
      %36 = sbr.rel (0) target = $region37
    $region36: #{tpu_custom_call.1} parent=1 // pred_region
      _
    $region37: #{tpu_custom_call.1} parent=1 // pred_fallthru
      _
    // Predicated region
    $region38: #{tpu_custom_call.1} parent=1 // pred_check
      _
    $region39: #{tpu_custom_call.1} parent=1 // pred_check_branch
      %38 = sbr.rel (0) target = $region41
    $region40: #{tpu_custom_call.1} parent=1 // pred_region
      _
    $region41: #{tpu_custom_call.1} parent=1 // pred_fallthru
      _
    // Predicated region
    $region42: #{tpu_custom_call.1} parent=1 // pred_check
      _
    $region43: #{tpu_custom_call.1} parent=1 // pred_check_branch
      %40 = sbr.rel (0) target = $region45
    $region44: #{tpu_custom_call.1} parent=1 // pred_region
      _
    $region45: #{tpu_custom_call.1} parent=1 // pred_fallthru
      _
    %v42 = vld [vmem:[%s0] sm:$0xff]
    %v43 = vld [vmem:[%s0 + $0x8] sm:$0xff]
    %v44 = vld [vmem:[%s0 + $0x10] sm:$0xff]
    %v45 = vld [vmem:[%s0 + $0x18] sm:$0xff]
    %v46 = vld [vmem:[%s0 + $0x20] sm:$0xff]
    %v47 = vld [vmem:[%s0 + $0x28] sm:$0xff]
    %v48 = vld [vmem:[%s0 + $0x30] sm:$0xff]
    %v49 = vld [vmem:[%s0 + $0x38] sm:$0xff]
    %v50 = vld [vmem:[%s0 + $0x40] sm:$0xff]
    %v51 = vld [vmem:[%s0 + $0x48] sm:$0xff]
    %v52 = vld [vmem:[%s0 + $0x50] sm:$0xff]
    %v53 = vld [vmem:[%s0 + $0x58] sm:$0xff]
    %v54 = vld [vmem:[%s0 + $0x60] sm:$0xff]
    %v55 = vld [vmem:[%s0 + $0x68] sm:$0xff]
    %v56 = vld [vmem:[%s0 + $0x70] sm:$0xff]
    %v57 = vld [vmem:[%s0 + $0x78] sm:$0xff]
    %58 = vxpose.xlu0.b32.start [1/16] %v42, 128
    %59 = vxpose.xlu0.b32.cont [2/16] %v43, 128
    %60 = vxpose.xlu0.b32.cont [3/16] %v44, 128
    %61 = vxpose.xlu0.b32.cont [4/16] %v45, 128
    %62 = vxpose.xlu0.b32.cont [5/16] %v46, 128
    %63 = vxpose.xlu0.b32.cont [6/16] %v47, 128
    %64 = vxpose.xlu0.b32.cont [7/16] %v48, 128
    %65 = vxpose.xlu0.b32.cont [8/16] %v49, 128
    %66 = vxpose.xlu0.b32.cont [9/16] %v50, 128
    %67 = vxpose.xlu0.b32.cont [10/16] %v51, 128
    %68 = vxpose.xlu0.b32.cont [11/16] %v52, 128
    %69 = vxpose.xlu0.b32.cont [12/16] %v53, 128
    %70 = vxpose.xlu0.b32.cont [13/16] %v54, 128
    %71 = vxpose.xlu0.b32.cont [14/16] %v55, 128
    %72 = vxpose.xlu0.b32.cont [15/16] %v56, 128
    %73 = vxpose.xlu0.b32.end [16/16] %v57, 128
    %v74 = vpop.trf.xlu0
    %v75 = vpop.trf.xlu0
    %v76 = vpop.trf.xlu0
    %v77 = vpop.trf.xlu0
    %v78 = vpop.trf.xlu0
    %v79 = vpop.trf.xlu0
    %v80 = vpop.trf.xlu0
    %v81 = vpop.trf.xlu0
    %v82 = vpop.trf.xlu0
    %v83 = vpop.trf.xlu0
    %v84 = vpop.trf.xlu0
    %v85 = vpop.trf.xlu0
    %v86 = vpop.trf.xlu0
    %v87 = vpop.trf.xlu0
    %v88 = vpop.trf.xlu0
    %v89 = vpop.trf.xlu0
    %v90 = vpack.c.bf16 %v75, %v74
    %v91 = vpack.c.bf16 %v77, %v76
    %v92 = vld [vmem:[%s1] sm:$0xf]
    %v93 = vld [vmem:[%s1 + $0x4] sm:$0xf]
    %v94 = vld [vmem:[%s1 + $0x8] sm:$0xf]
    %v95 = vld [vmem:[%s1 + $0xc] sm:$0xf]
    %v96 = vld [vmem:[%s2] sm:$0xff]
    %v97 = vld [vmem:[%s2 + $0x8] sm:$0xff]
    %v98 = vld [vmem:[%s2 + $0x10] sm:$0xff]
    %v99 = vld [vmem:[%s2 + $0x18] sm:$0xff]
    %101 = vset.pattern.permute.xlu0 0
    %102 = vperm.xlu0 %101, %v96
    %v103 = vpop.permute.xlu0 %102
    %106 = vset.pattern.permute.xlu0 0
    %107 = vperm.xlu0 %106, %v97
    %v108 = vpop.permute.xlu0 %107
    %111 = vset.pattern.permute.xlu0 0
    %112 = vperm.xlu0 %111, %v98
    %v113 = vpop.permute.xlu0 %112
    %116 = vset.pattern.permute.xlu0 0
    %117 = vperm.xlu0 %116, %v99
    %v118 = vpop.permute.xlu0 %117
    %v124 = vunpack.c.l.b16 %v92
    %v125 = vunpack.c.l.b16 %v93
    %v126 = vunpack.c.l.b16 %v94
    %v127 = vunpack.c.l.b16 %v95
    %v128 = vpack.c.b16 %v125, %v124
    %v129 = vpack.c.b16 %v127, %v126
    %vm130 = vcmask 211968
    %v132 = vsel %vm130, %v128, 0
    %v135 = vsel %vm130, %v129, 0
    %vm137 = vcmask 1044480
    %v139 = vsel %vm137, %v91, 0
    %141 = vmatprep.subr.bf16.mxu0 0
    %142 = vmatpush1.bf16.msra.mxu0 %v90
    %143 = vmatprep.subr.bf16.mxu0 0
    %144 = vmatpush1.bf16.msra.mxu0 %v139
    %145 = vmatprep.subr.bf16.mxu0 0
    %146 = vmatpush1.bf16.msra.mxu0 0
    %147 = vmatprep.subr.bf16.mxu0 0
    %148 = vmatpush1.bf16.msra.mxu0 0
    %149 = vmatprep.subr.bf16.mxu0 0
    %150 = vmatpush1.bf16.msra.mxu0 0
    %151 = vmatprep.subr.bf16.mxu0 0
    %152 = vmatpush1.bf16.msra.mxu0 0
    %153 = vmatprep.subr.bf16.mxu0 0
    %154 = vmatpush1.bf16.msra.mxu0 0
    %155 = vmatprep.subr.bf16.mxu0 0
    %156 = vmatpush1.bf16.msra.mxu0 0
    %157 = vmatprep.subr.bf16.mxu0 0
    %158 = vmatpush1.bf16.msra.mxu0 0
    %159 = vmatprep.subr.bf16.mxu0 0
    %160 = vmatpush1.bf16.msra.mxu0 0
    %161 = vmatprep.subr.bf16.mxu0 0
    %162 = vmatpush1.bf16.msra.mxu0 0
    %163 = vmatprep.subr.bf16.mxu0 0
    %164 = vmatpush1.bf16.msra.mxu0 0
    %165 = vmatprep.subr.bf16.mxu0 0
    %166 = vmatpush1.bf16.msra.mxu0 0
    %167 = vmatprep.subr.bf16.mxu0 0
    %168 = vmatpush1.bf16.msra.mxu0 0
    %169 = vmatprep.subr.bf16.mxu0 0
    %170 = vmatpush1.bf16.msra.mxu0 0
    %171 = vmatprep.subr.bf16.mxu0 0
    %172 = vmatpush1.bf16.msra.mxu0 0
    %173 = vmatprep.mubr.bf16.mxu0 0
    %174 = vmatmul.mubr.bf16.gmra.mrb[0].mxu0 %v132
    %v175 = vpop.f32.mrb[0].mxu0
    %v176 = vadd.f32 %v103, %v175
    %v177 = vpop.f32.mrb[0].mxu0
    %v178 = vpop.f32.mrb[0].mxu0
    %v179 = vadd.f32 %v108, %v178
    %v180 = vpop.f32.mrb[0].mxu0
    %181 = vmatprep.mubr.bf16.mxu0 0
    %182 = vmatmul.mubr.bf16.gmra.mrb[0].mxu0 %v135
    %v183 = vpop.f32.mrb[0].mxu0
    %v184 = vadd.f32 %v113, %v183
    %v185 = vpop.f32.mrb[0].mxu0
    %v186 = vpop.f32.mrb[0].mxu0
    %v187 = vadd.f32 %v118, %v186
    %v188 = vpop.f32.mrb[0].mxu0
    %189 = vdwg.mxu0
    %v190 = vmax.f32 %v176, 0.0
    %v191 = vmax.f32 %v179, 0.0
    %v192 = vmax.f32 %v184, 0.0
    %v193 = vmax.f32 %v187, 0.0
    %v194 = vpack.c.bf16 %v191, %v190
    %v195 = vpack.c.bf16 %v193, %v192
    %v196 = vld [vmem:[%s3] sm:$0xf]
    %v197 = vld [vmem:[%s3 + $0x4] sm:$0xf]
    %v198 = vld [vmem:[%s3 + $0x8] sm:$0xf]
    %v199 = vld [vmem:[%s3 + $0xc] sm:$0xf]
    %v200 = vld [vmem:[%s4] sm:$0xff]
    %v201 = vld [vmem:[%s4 + $0x8] sm:$0xff]
    %v202 = vld [vmem:[%s4 + $0x10] sm:$0xff]
    %v203 = vld [vmem:[%s4 + $0x18] sm:$0xff]
    %205 = vset.pattern.permute.xlu0 0
    %206 = vperm.xlu0 %205, %v200
    %v207 = vpop.permute.xlu0 %206
    %210 = vset.pattern.permute.xlu0 0
    %211 = vperm.xlu0 %210, %v201
    %v212 = vpop.permute.xlu0 %211
    %215 = vset.pattern.permute.xlu0 0
    %216 = vperm.xlu0 %215, %v202
    %v217 = vpop.permute.xlu0 %216
    %220 = vset.pattern.permute.xlu0 0
    %221 = vperm.xlu0 %220, %v203
    %v222 = vpop.permute.xlu0 %221
    %v228 = vunpack.c.l.b16 %v196
    %v229 = vunpack.c.l.b16 %v197
    %v230 = vunpack.c.l.b16 %v198
    %v231 = vunpack.c.l.b16 %v199
    %v232 = vpack.c.b16 %v229, %v228
    %v233 = vpack.c.b16 %v231, %v230
    %vm234 = vcmask 261120
    %v236 = vsel %vm234, %v232, 0
    %v239 = vsel %vm234, %v233, 0
    %241 = vmatprep.subr.bf16.mxu0 0
    %242 = vmatpush1.bf16.msra.mxu0 %v194
    %243 = vmatprep.subr.bf16.mxu0 0
    %244 = vmatpush1.bf16.msra.mxu0 %v195
    %245 = vmatprep.subr.bf16.mxu0 0
    %246 = vmatpush1.bf16.msra.mxu0 0
    %247 = vmatprep.subr.bf16.mxu0 0
    %248 = vmatpush1.bf16.msra.mxu0 0
    %249 = vmatprep.subr.bf16.mxu0 0
    %250 = vmatpush1.bf16.msra.mxu0 0
    %251 = vmatprep.subr.bf16.mxu0 0
    %252 = vmatpush1.bf16.msra.mxu0 0
    %253 = vmatprep.subr.bf16.mxu0 0
    %254 = vmatpush1.bf16.msra.mxu0 0
    %255 = vmatprep.subr.bf16.mxu0 0
    %256 = vmatpush1.bf16.msra.mxu0 0
    %257 = vmatprep.subr.bf16.mxu0 0
    %258 = vmatpush1.bf16.msra.mxu0 0
    %259 = vmatprep.subr.bf16.mxu0 0
    %260 = vmatpush1.bf16.msra.mxu0 0
    %261 = vmatprep.subr.bf16.mxu0 0
    %262 = vmatpush1.bf16.msra.mxu0 0
    %263 = vmatprep.subr.bf16.mxu0 0
    %264 = vmatpush1.bf16.msra.mxu0 0
    %265 = vmatprep.subr.bf16.mxu0 0
    %266 = vmatpush1.bf16.msra.mxu0 0
    %267 = vmatprep.subr.bf16.mxu0 0
    %268 = vmatpush1.bf16.msra.mxu0 0
    %269 = vmatprep.subr.bf16.mxu0 0
    %270 = vmatpush1.bf16.msra.mxu0 0
    %271 = vmatprep.subr.bf16.mxu0 0
    %272 = vmatpush1.bf16.msra.mxu0 0
    %273 = vmatprep.mubr.bf16.mxu0 0
    %274 = vmatmul.mubr.bf16.gmra.mrb[0].mxu0 %v236
    %v275 = vpop.f32.mrb[0].mxu0
    %v276 = vadd.f32 %v207, %v275
    %v277 = vpop.f32.mrb[0].mxu0
    %v278 = vpop.f32.mrb[0].mxu0
    %v279 = vadd.f32 %v212, %v278
    %v280 = vpop.f32.mrb[0].mxu0
    %281 = vmatprep.mubr.bf16.mxu0 0
    %282 = vmatmul.mubr.bf16.gmra.mrb[0].mxu0 %v239
    %v283 = vpop.f32.mrb[0].mxu0
    %v284 = vadd.f32 %v217, %v283
    %v285 = vpop.f32.mrb[0].mxu0
    %v286 = vpop.f32.mrb[0].mxu0
    %v287 = vadd.f32 %v222, %v286
    %v288 = vpop.f32.mrb[0].mxu0
    %289 = vdwg.mxu0
    %v290 = vmax.f32 %v276, 0.0
    %v291 = vmax.f32 %v279, 0.0
    %v292 = vmax.f32 %v284, 0.0
    %v293 = vmax.f32 %v287, 0.0
    %v294 = vpack.c.bf16 %v291, %v290
    %v295 = vpack.c.bf16 %v293, %v292
    %v296 = vld [vmem:[%s5] sm:$0xf]
    %v297 = vld [vmem:[%s5 + $0x4] sm:$0xf]
    %v298 = vld [vmem:[%s6] sm:$0xff]
    %v299 = vld [vmem:[%s6 + $0x8] sm:$0xff]
    %301 = vset.pattern.permute.xlu0 0
    %302 = vperm.xlu0 %301, %v298
    %v303 = vpop.permute.xlu0 %302
    %306 = vset.pattern.permute.xlu0 0
    %307 = vperm.xlu0 %306, %v299
    %v308 = vpop.permute.xlu0 %307
    %v312 = vunpack.c.l.b16 %v296
    %v313 = vunpack.c.l.b16 %v297
    %v314 = vpack.c.b16 %v313, %v312
    %v316 = vsel %vm234, %v314, 0
    %318 = vmatprep.subr.bf16.mxu0 0
    %319 = vmatpush1.bf16.msra.mxu0 %v294
    %320 = vmatprep.subr.bf16.mxu0 0
    %321 = vmatpush1.bf16.msra.mxu0 %v295
    %322 = vmatprep.subr.bf16.mxu0 0
    %323 = vmatpush1.bf16.msra.mxu0 0
    %324 = vmatprep.subr.bf16.mxu0 0
    %325 = vmatpush1.bf16.msra.mxu0 0
    %326 = vmatprep.subr.bf16.mxu0 0
    %327 = vmatpush1.bf16.msra.mxu0 0
    %328 = vmatprep.subr.bf16.mxu0 0
    %329 = vmatpush1.bf16.msra.mxu0 0
    %330 = vmatprep.subr.bf16.mxu0 0
    %331 = vmatpush1.bf16.msra.mxu0 0
    %332 = vmatprep.subr.bf16.mxu0 0
    %333 = vmatpush1.bf16.msra.mxu0 0
    %334 = vmatprep.subr.bf16.mxu0 0
    %335 = vmatpush1.bf16.msra.mxu0 0
    %336 = vmatprep.subr.bf16.mxu0 0
    %337 = vmatpush1.bf16.msra.mxu0 0
    %338 = vmatprep.subr.bf16.mxu0 0
    %339 = vmatpush1.bf16.msra.mxu0 0
    %340 = vmatprep.subr.bf16.mxu0 0
    %341 = vmatpush1.bf16.msra.mxu0 0
    %342 = vmatprep.subr.bf16.mxu0 0
    %343 = vmatpush1.bf16.msra.mxu0 0
    %344 = vmatprep.subr.bf16.mxu0 0
    %345 = vmatpush1.bf16.msra.mxu0 0
    %346 = vmatprep.subr.bf16.mxu0 0
    %347 = vmatpush1.bf16.msra.mxu0 0
    %348 = vmatprep.subr.bf16.mxu0 0
    %349 = vmatpush1.bf16.msra.mxu0 0
    %350 = vmatprep.mubr.bf16.mxu0 0
    %351 = vmatmul.mubr.bf16.gmra.mrb[0].mxu0 %v316
    %v352 = vpop.f32.mrb[0].mxu0
    %v353 = vadd.f32 %v303, %v352
    %v354 = vpop.f32.mrb[0].mxu0
    %v355 = vpop.f32.mrb[0].mxu0
    %v356 = vadd.f32 %v308, %v355
    %v357 = vpop.f32.mrb[0].mxu0
    %358 = vdwg.mxu0
    %v359 = vmax.f32 %v353, 0.0
    %v360 = vmax.f32 %v356, 0.0
    %v361 = vpack.c.bf16 %v360, %v359
    %v362 = vld [vmem:[%s7] sm:$0xf]
    %v363 = vld [vmem:[%s8] sm:$0xff]
    %365 = vset.pattern.permute.xlu0 0
    %366 = vperm.xlu0 %365, %v363
    %v367 = vpop.permute.xlu0 %366
    %vm369 = vcmask 130048
    %v371 = vsel %vm369, %v362, 0
    %373 = vmatprep.subr.bf16.mxu0 0
    %374 = vmatpush1.bf16.msra.mxu0 %v361
    %375 = vmatprep.subr.bf16.mxu0 0
    %376 = vmatpush1.bf16.msra.mxu0 0
    %377 = vmatprep.subr.bf16.mxu0 0
    %378 = vmatpush1.bf16.msra.mxu0 0
    %379 = vmatprep.subr.bf16.mxu0 0
    %380 = vmatpush1.bf16.msra.mxu0 0
    %381 = vmatprep.subr.bf16.mxu0 0
    %382 = vmatpush1.bf16.msra.mxu0 0
    %383 = vmatprep.subr.bf16.mxu0 0
    %384 = vmatpush1.bf16.msra.mxu0 0
    %385 = vmatprep.subr.bf16.mxu0 0
    %386 = vmatpush1.bf16.msra.mxu0 0
    %387 = vmatprep.subr.bf16.mxu0 0
    %388 = vmatpush1.bf16.msra.mxu0 0
    %389 = vmatprep.subr.bf16.mxu0 0
    %390 = vmatpush1.bf16.msra.mxu0 0
    %391 = vmatprep.subr.bf16.mxu0 0
    %392 = vmatpush1.bf16.msra.mxu0 0
    %393 = vmatprep.subr.bf16.mxu0 0
    %394 = vmatpush1.bf16.msra.mxu0 0
    %395 = vmatprep.subr.bf16.mxu0 0
    %396 = vmatpush1.bf16.msra.mxu0 0
    %397 = vmatprep.subr.bf16.mxu0 0
    %398 = vmatpush1.bf16.msra.mxu0 0
    %399 = vmatprep.subr.bf16.mxu0 0
    %400 = vmatpush1.bf16.msra.mxu0 0
    %401 = vmatprep.subr.bf16.mxu0 0
    %402 = vmatpush1.bf16.msra.mxu0 0
    %403 = vmatprep.subr.bf16.mxu0 0
    %404 = vmatpush1.bf16.msra.mxu0 0
    %405 = vmatprep.mubr.bf16.mxu0 0
    %406 = vmatmul.mubr.bf16.gmra.mrb[0].mxu0 %v371
    %v407 = vpop.f32.mrb[0].mxu0
    %v408 = vadd.f32 %v367, %v407
    %v409 = vpop.f32.mrb[0].mxu0
    %v410 = vpop.f32.mrb[0].mxu0
    %v411 = vpop.f32.mrb[0].mxu0
    %412 = vdwg.mxu0
    %v413 = vmax.f32 %v408, 0.0
    %v414 = vpack.c.bf16 %v413, %v413
    %v415 = vld [vmem:[%s9] sm:$0x1]
    %v416 = vld [vmem:[#allocation2] sm:$0x1]
    %418 = vset.pattern.permute.xlu0 0
    %419 = vperm.xlu0 %418, %v416
    %v420 = vpop.permute.xlu0 %419
    %v422 = vlaneseq
    %v423 = vshrl.u32 %v422, 7
    %v424 = vsub.s32 0, %v423
    %v425 = vrot.slane %v420, %v424
    %vm426 = vcmask 64512
    %v428 = vsel %vm426, %v415, 0
    %vm430 = vcmask 1043456
    %v432 = vsel %vm430, %v414, 0
    %434 = vmatprep.subr.bf16.mxu0 0
    %435 = vmatpush1.bf16.msra.mxu0 %v432
    %436 = vmatprep.subr.bf16.mxu0 0
    %437 = vmatpush1.bf16.msra.mxu0 0
    %438 = vmatprep.subr.bf16.mxu0 0
    %439 = vmatpush1.bf16.msra.mxu0 0
    %440 = vmatprep.subr.bf16.mxu0 0
    %441 = vmatpush1.bf16.msra.mxu0 0
    %442 = vmatprep.subr.bf16.mxu0 0
    %443 = vmatpush1.bf16.msra.mxu0 0
    %444 = vmatprep.subr.bf16.mxu0 0
    %445 = vmatpush1.bf16.msra.mxu0 0
    %446 = vmatprep.subr.bf16.mxu0 0
    %447 = vmatpush1.bf16.msra.mxu0 0
    %448 = vmatprep.subr.bf16.mxu0 0
    %449 = vmatpush1.bf16.msra.mxu0 0
    %450 = vmatprep.subr.bf16.mxu0 0
    %451 = vmatpush1.bf16.msra.mxu0 0
    %452 = vmatprep.subr.bf16.mxu0 0
    %453 = vmatpush1.bf16.msra.mxu0 0
    %454 = vmatprep.subr.bf16.mxu0 0
    %455 = vmatpush1.bf16.msra.mxu0 0
    %456 = vmatprep.subr.bf16.mxu0 0
    %457 = vmatpush1.bf16.msra.mxu0 0
    %458 = vmatprep.subr.bf16.mxu0 0
    %459 = vmatpush1.bf16.msra.mxu0 0
    %460 = vmatprep.subr.bf16.mxu0 0
    %461 = vmatpush1.bf16.msra.mxu0 0
    %462 = vmatprep.subr.bf16.mxu0 0
    %463 = vmatpush1.bf16.msra.mxu0 0
    %464 = vmatprep.subr.bf16.mxu0 0
    %465 = vmatpush1.bf16.msra.mxu0 0
    %466 = vmatprep.mubr.bf16.mxu0 0
    %467 = vmatmul.mubr.bf16.gmra.mrb[0].mxu0 %v428
    %v468 = vpop.f32.mrb[0].mxu0
    %v469 = vadd.f32 %v425, %v468
    %v470 = vpop.f32.mrb[0].mxu0
    %v471 = vpop.f32.mrb[0].mxu0
    %v472 = vpop.f32.mrb[0].mxu0
    %473 = vdwg.mxu0
    %v474 = vsub.f32 0.0, %v469
    %v475 = vmul.f32 %v474, 1.442695
    %v476 = vpow.pop %v475
    %v477 = vadd.f32 %v476, 1.0
    %v478 = vrcp.pop %v477
    %v479 = vmul.f32 1.0, %v478
    %480 = vst [vmem:[#allocation3] sm:$0x1] %v479
    // Predicated region
    $region46: #{tpu_custom_call.1} parent=1 // pred_check
      _
    $region47: #{tpu_custom_call.1} parent=1 // pred_check_branch
      %482 = sbr.rel (0) target = $region49
    $region48: #{tpu_custom_call.1} parent=1 // pred_region
      %s484 = ssub.s32 16, 16
      %485 = vsyncadd [#allocation4], %s484
      %s487 = sshll.u32 [#allocation3], 4
      %s488 = int_to_ptr.vmem [resolvable:$true] %s487
      %490 = dma.vmem_to_hbm [thread:$0]  %s488, 16, %s11, [#allocation4]
    $region49: #{tpu_custom_call.1} parent=1 // pred_fallthru
      _
    // Predicated region
    $region50: #{tpu_custom_call.1} parent=1 // pred_check
      _
    $region51: #{tpu_custom_call.1} parent=1 // pred_check_branch
      %492 = sbr.rel (0) target = $region53
    $region52: #{tpu_custom_call.1} parent=1 // pred_region
      %493 = dma.done [#allocation4], 16
    $region53: #{tpu_custom_call.1} parent=1 // pred_fallthru
      _
    %494 = vsyncpa [#allocation4], 1

</llo_original>
